<compile_context>
chip_gen: v6e
topology: v6e:2x2x1
jax: 0.10.0
libtpu: 0.0.40
codegen_flags: <defaults>
</compile_context>

<pallas_src>
import functools

import jax
import jax.numpy as jnp
from jax import lax
from jax.experimental import pallas as pl
from jax.experimental.pallas import tpu as pltpu


def _dino_loss_kernel(student_ref, teacher_ref, center_ref, s_reg_ref, t_reg_ref,
                      part_ref, *, inv_student_temp, inv_teacher_temp,
                      batch, tile_rows):
    # global row index of each row of this tile; rows >= batch are padding from
    # the pl.cdiv grid's partial last block and must not contribute.
    i = pl.program_id(0)
    row_ids = i * tile_rows + lax.broadcasted_iota(jnp.int32, (tile_rows, 1), 0)
    valid = row_ids < batch                                                # (tb, 1)

    # ---- DINO cross-entropy partial sum for this batch tile ----
    s = student_ref[...].astype(jnp.float32) * inv_student_temp           # (tb, D)
    t = (teacher_ref[...].astype(jnp.float32)
         - center_ref[...].astype(jnp.float32)) * inv_teacher_temp        # (tb, D)
    # zero padding rows up-front so every downstream value is finite
    s = jnp.where(valid, s, 0.0)
    t = jnp.where(valid, t, 0.0)

    # student log-softmax pieces (log_p_s never materialized)
    s_max = jnp.max(s, axis=-1, keepdims=True)
    s_shift = s - s_max                                                    # (tb, D)
    s_lse = jnp.log(jnp.sum(jnp.exp(s_shift), axis=-1, keepdims=True))     # (tb, 1)

    # teacher softmax without the per-element divide
    t_max = jnp.max(t, axis=-1, keepdims=True)
    t_exp = jnp.exp(t - t_max)                                             # (tb, D)
    t_sum = jnp.sum(t_exp, axis=-1, keepdims=True)                         # (tb, 1)
    # EUP vrcp seed + one Newton step on a (tb,1) vector: frees the VPU divide
    # chain while keeping f32 accuracy (verified vs. dino_loss_ref).
    inv_t = pl.reciprocal(t_sum, approx=True)
    inv_t = inv_t * (2.0 - t_sum * inv_t)

    # sum_D(p_t * log_p_s) = inv_t * sum_D(t_exp * s_shift) - s_lse   (sum_D p_t = 1)
    ce_row = inv_t * jnp.sum(t_exp * s_shift, axis=-1, keepdims=True) - s_lse
    ce_partial = jnp.sum(jnp.where(valid, ce_row, 0.0))                    # scalar

    # ---- register consistency (sum of squared error) partial ----
    diff = s_reg_ref[...].astype(jnp.float32) - t_reg_ref[...].astype(jnp.float32)
    diff = jnp.where(valid, diff, 0.0)
    sq_partial = jnp.sum(diff * diff)                                      # scalar

    # ---- write partials into this tile's own lane-dense output block ----
    # row 0 / lane 0 -> CE partial, row 1 / lane 0 -> squared-error partial, rest 0.
    rows = lax.broadcasted_iota(jnp.int32, part_ref.shape, 1)
    lanes = lax.broadcasted_iota(jnp.int32, part_ref.shape, 2)
    vals = jnp.where(rows == 0, ce_partial, sq_partial)
    part_ref[...] = jnp.where((lanes == 0) & (rows < 2), vals, 0.0)


def _round_up(x, m):
    return ((x + m - 1) // m) * m


def _tpu_vmem_profile():
    """(per-core VMEM bytes, whether to assume a multi-TensorCore chip)."""
    vmem = None
    try:
        info = pltpu.get_tpu_info()
        vmem = getattr(info, "vmem_capacity_bytes", None)
    except Exception:
        vmem = None
    if not vmem:
        vmem = 64 << 20          # conservative fallback: fits every generation
    vmem = int(vmem)
    # <= 64 MiB per core => v7x-class chip with 2 TensorCores: make sure the
    # "parallel" grid has >= 2 steps so both cores get work.
    multi_tc = vmem <= (64 << 20)
    return vmem, multi_tc


def _pick_batch_tile(B, row_bytes, budget_bytes, min_grid_steps):
    """Largest sublane-legal batch tile (multiple of 8, or B when B <= 8) that
    fits the VMEM budget; optionally capped so the grid has >= min_grid_steps."""
    if B <= 8:
        return B                                      # full dim block is always legal
    cap = max(8, ((budget_bytes // max(row_bytes, 1)) // 8) * 8)
    tb = min(cap, _round_up(B, 8))
    if min_grid_steps >= 2:
        tb = min(tb, max(8, ((B - 1) // 8) * 8))      # guarantees cdiv(B, tb) >= 2
    return tb


def dino_loss(student_output, teacher_output, center, s_reg, t_reg,
              *, student_temp=0.1, teacher_temp=0.04, reg_weight=0.1,
              batch_tile=None):
    B, D = student_output.shape
    Bn, N, Dr = s_reg.shape
    assert Bn == B and t_reg.shape == s_reg.shape
    NR = N * Dr

    # flatten registers so the kernel deals with 2-D (rows, feature) tiles
    s_reg2 = s_reg.reshape(B, NR)
    t_reg2 = t_reg.reshape(B, NR)
    reg_count = float(B * NR)

    vmem_bytes, multi_tc = _tpu_vmem_profile()
    # ~1/3 of per-core VMEM for the (double-buffered) tile working set:
    #   ~42 MiB on 128 MiB v5e/v6e, ~21 MiB on 64 MiB v7x.
    tile_budget = min(vmem_bytes // 3, 48 << 20)
    # scoped VMEM limit: ~96 MiB on v5e/v6e, 48 MiB on v7x.
    vmem_limit = min((vmem_bytes * 3) // 4, 100 << 20)

    if batch_tile is None:
        in_bytes = (student_output.dtype.itemsize * D
                    + teacher_output.dtype.itemsize * D
                    + s_reg2.dtype.itemsize * NR
                    + t_reg2.dtype.itemsize * NR)
        # double-buffered input blocks + ~6 live f32 (tb,D) CE intermediates
        # (s, t, s_shift, exp(s_shift), t_exp, t_exp*s_shift) + ~2 live f32
        # (tb,NR) register intermediates (diff, diff*diff).
        row_bytes = 2 * in_bytes + 4 * (6 * D + 2 * NR)
        batch_tile = _pick_batch_tile(B, row_bytes, tile_budget,
                                      min_grid_steps=2 if multi_tc else 1)
    tb = batch_tile
    assert tb == B or tb % 8 == 0, "batch tile must be sublane-aligned or == B"
    G = pl.cdiv(B, tb)

    kernel = functools.partial(
        _dino_loss_kernel,
        inv_student_temp=1.0 / float(student_temp),
        inv_teacher_temp=1.0 / float(teacher_temp),
        batch=B,
        tile_rows=tb,
    )

    parts = pl.pallas_call(
        kernel,
        out_shape=jax.ShapeDtypeStruct((G, 8, 128), jnp.float32),
        grid_spec=pltpu.PrefetchScalarGridSpec(
            num_scalar_prefetch=0,
            grid=(G,),
            in_specs=[
                pl.BlockSpec((tb, D), lambda i: (i, 0)),     # student
                pl.BlockSpec((tb, D), lambda i: (i, 0)),     # teacher
                pl.BlockSpec((1, D), lambda i: (0, 0)),      # center (revisited, 1 DMA)
                pl.BlockSpec((tb, NR), lambda i: (i, 0)),    # s_reg (flattened)
                pl.BlockSpec((tb, NR), lambda i: (i, 0)),    # t_reg (flattened)
            ],
            out_specs=pl.BlockSpec((1, 8, 128), lambda i: (i, 0, 0)),
        ),
        compiler_params=pltpu.CompilerParams(
            # Independent tiles: lets the runtime shard the grid across both
            # TensorCores on v7x; harmless on single-TC v5e/v6e.
            dimension_semantics=("parallel",),
            vmem_limit_bytes=int(vmem_limit),
        ),
    )(student_output, teacher_output, center, s_reg2, t_reg2)

    # tiny final reduction over G per-tile partials (done in plain JAX)
    ce_sum = jnp.sum(parts[:, 0, 0])
    sq_sum = jnp.sum(parts[:, 1, 0])
    loss = -ce_sum / float(B)
    reg_loss = sq_sum / reg_count
    return loss + reg_weight * reg_loss


def dino_loss_ref(student_output, teacher_output, center, s_reg, t_reg,
                  *, student_temp=0.1, teacher_temp=0.04, reg_weight=0.1):
    """Pure-JAX reference mirroring the PyTorch forward."""
    s = student_output / student_temp
    t = (teacher_output - center) / teacher_temp
    log_p_s = jax.nn.log_softmax(s, axis=-1)
    p_t = jax.nn.softmax(t, axis=-1)
    loss = -jnp.mean(jnp.sum(p_t * log_p_s, axis=-1))
    reg_loss = jnp.mean((s_reg - t_reg) ** 2)
    return loss + reg_weight * reg_loss


if __name__ == "__main__":
    # small shapes consistent with the module's forward:
    #   student/teacher : (B, D); registers : (B, N, D)
    B, D, N = 16, 256, 4

    key = jax.random.PRNGKey(0)
    k1, k2, k3, k4 = jax.random.split(key, 4)
    student = jax.random.normal(k1, (B, D), dtype=jnp.float32)
    teacher = jax.random.normal(k2, (B, D), dtype=jnp.float32)
    s_reg = jax.random.normal(k3, (B, N, D), dtype=jnp.float32)
    t_reg = jax.random.normal(k4, (B, N, D), dtype=jnp.float32)
    # register_buffer('center', zeros(1, output_dim)) -> deterministic zeros
    center = jnp.zeros((1, D), dtype=jnp.float32)

    out = jax.block_until_ready(dino_loss(student, teacher, center, s_reg, t_reg))
    ref = dino_loss_ref(student, teacher, center, s_reg, t_reg)
    assert jnp.allclose(out, ref, rtol=2e-4, atol=2e-4), (out, ref)

    # ragged batch (not a multiple of the 8-row sublane tile) exercises the
    # masked last tile produced by the pl.cdiv grid.
    B2 = 13
    out2 = jax.block_until_ready(
        dino_loss(student[:B2], teacher[:B2], center, s_reg[:B2], t_reg[:B2]))
    ref2 = dino_loss_ref(student[:B2], teacher[:B2], center, s_reg[:B2], t_reg[:B2])
    assert jnp.allclose(out2, ref2, rtol=2e-4, atol=2e-4), (out2, ref2)

    print("KERNEL_OK")
</pallas_src>

<mosaic_0001>
module attributes {stable_mosaic.version = 11 : i64} {
  func.func @_dino_loss_kernel(%arg0: i32, %arg1: memref<8x256xf32, #tpu.memory_space<vmem>>, %arg2: memref<8x256xf32, #tpu.memory_space<vmem>>, %arg3: memref<1x256xf32, #tpu.memory_space<vmem>>, %arg4: memref<8x1024xf32, #tpu.memory_space<vmem>>, %arg5: memref<8x1024xf32, #tpu.memory_space<vmem>>, %arg6: memref<1x8x128xf32, #tpu.memory_space<vmem>>) attributes {dimension_semantics = [#tpu.dimension_semantics<parallel>], iteration_bounds = array<i64: 2>, scalar_prefetch = 0 : i64, scratch_operands = 0 : i64, tpu.core_type = #tpu.core_type<tc>, window_params = [{transform_indices = @transform_0, window_bounds = array<i64: 8, 256>}, {transform_indices = @transform_1, window_bounds = array<i64: 8, 256>}, {pipeline_mode = #tpu.pipeline_mode<synchronous>, transform_indices = @transform_2, window_bounds = array<i64: 1, 256>}, {transform_indices = @transform_3, window_bounds = array<i64: 8, 1024>}, {transform_indices = @transform_4, window_bounds = array<i64: 8, 1024>}, {transform_indices = @transform_5, window_bounds = array<i64: 1, 8, 128>}]} {
    %c8_i32 = arith.constant 8 : i32
    %0 = arith.muli %arg0, %c8_i32 : i32
    %1 = tpu.iota {dimensions = array<i32: 0>} : vector<8x1xi32>
    %2 = vector.broadcast %0 : i32 to vector<8x1xi32>
    %3 = arith.addi %2, %1 : vector<8x1xi32>
    %c16_i32 = arith.constant 16 : i32
    %4 = vector.broadcast %c16_i32 : i32 to vector<8x1xi32>
    %5 = arith.cmpi slt, %3, %4 : vector<8x1xi32>
    %c0 = arith.constant 0 : index
    %c0_0 = arith.constant 0 : index
    %6 = vector.load %arg1[%c0, %c0_0] : memref<8x256xf32, #tpu.memory_space<vmem>>, vector<8x256xf32>
    %cst = arith.constant 1.000000e+01 : f32
    %7 = vector.broadcast %cst : f32 to vector<8x256xf32>
    %8 = arith.mulf %6, %7 : vector<8x256xf32>
    %c0_1 = arith.constant 0 : index
    %c0_2 = arith.constant 0 : index
    %9 = vector.load %arg2[%c0_1, %c0_2] : memref<8x256xf32, #tpu.memory_space<vmem>>, vector<8x256xf32>
    %c0_3 = arith.constant 0 : index
    %c0_4 = arith.constant 0 : index
    %10 = vector.load %arg3[%c0_3, %c0_4] : memref<1x256xf32, #tpu.memory_space<vmem>>, vector<1x256xf32>
    %11 = vector.broadcast %10 : vector<1x256xf32> to vector<8x256xf32>
    %12 = arith.subf %9, %11 : vector<8x256xf32>
    %cst_5 = arith.constant 2.500000e+01 : f32
    %13 = vector.broadcast %cst_5 : f32 to vector<8x256xf32>
    %14 = arith.mulf %12, %13 : vector<8x256xf32>
    %cst_6 = arith.constant 0.000000e+00 : f32
    %15 = vector.shape_cast %5 : vector<8x1xi1> to vector<8x1xi1>
    %16 = vector.broadcast %15 : vector<8x1xi1> to vector<8x256xi1>
    %17 = vector.broadcast %cst_6 : f32 to vector<8x256xf32>
    %18 = arith.select %16, %8, %17 : vector<8x256xi1>, vector<8x256xf32>
    %cst_7 = arith.constant 0.000000e+00 : f32
    %19 = vector.shape_cast %5 : vector<8x1xi1> to vector<8x1xi1>
    %20 = vector.broadcast %19 : vector<8x1xi1> to vector<8x256xi1>
    %21 = vector.broadcast %cst_7 : f32 to vector<8x256xf32>
    %22 = arith.select %20, %14, %21 : vector<8x256xi1>, vector<8x256xf32>
    %cst_8 = arith.constant dense<0xFF800000> : vector<8xf32>
    %23 = vector.multi_reduction <maximumf>, %18, %cst_8 [1] : vector<8x256xf32> to vector<8xf32>
    %24 = vector.shape_cast %23 : vector<8xf32> to vector<8x1xf32>
    %25 = vector.broadcast %24 : vector<8x1xf32> to vector<8x256xf32>
    %26 = arith.subf %18, %25 : vector<8x256xf32>
    %27 = math.exp %26 : vector<8x256xf32>
    %cst_9 = arith.constant dense<0.000000e+00> : vector<8xf32>
    %28 = vector.multi_reduction <add>, %27, %cst_9 [1] : vector<8x256xf32> to vector<8xf32>
    %29 = vector.shape_cast %28 : vector<8xf32> to vector<8x1xf32>
    %30 = math.log %29 : vector<8x1xf32>
    %cst_10 = arith.constant dense<0xFF800000> : vector<8xf32>
    %31 = vector.multi_reduction <maximumf>, %22, %cst_10 [1] : vector<8x256xf32> to vector<8xf32>
    %32 = vector.shape_cast %31 : vector<8xf32> to vector<8x1xf32>
    %33 = vector.broadcast %32 : vector<8x1xf32> to vector<8x256xf32>
    %34 = arith.subf %22, %33 : vector<8x256xf32>
    %35 = math.exp %34 : vector<8x256xf32>
    %cst_11 = arith.constant dense<0.000000e+00> : vector<8xf32>
    %36 = vector.multi_reduction <add>, %35, %cst_11 [1] : vector<8x256xf32> to vector<8xf32>
    %37 = vector.shape_cast %36 : vector<8xf32> to vector<8x1xf32>
    %38 = tpu.reciprocal %37 {approx = true} : vector<8x1xf32> -> vector<8x1xf32>
    %39 = arith.mulf %37, %38 : vector<8x1xf32>
    %cst_12 = arith.constant 2.000000e+00 : f32
    %40 = vector.broadcast %cst_12 : f32 to vector<8x1xf32>
    %41 = arith.subf %40, %39 : vector<8x1xf32>
    %42 = arith.mulf %38, %41 : vector<8x1xf32>
    %43 = arith.mulf %35, %26 : vector<8x256xf32>
    %cst_13 = arith.constant dense<0.000000e+00> : vector<8xf32>
    %44 = vector.multi_reduction <add>, %43, %cst_13 [1] : vector<8x256xf32> to vector<8xf32>
    %45 = vector.shape_cast %44 : vector<8xf32> to vector<8x1xf32>
    %46 = arith.mulf %42, %45 : vector<8x1xf32>
    %47 = arith.subf %46, %30 : vector<8x1xf32>
    %cst_14 = arith.constant 0.000000e+00 : f32
    %48 = vector.broadcast %cst_14 : f32 to vector<8x1xf32>
    %49 = arith.select %5, %47, %48 : vector<8x1xi1>, vector<8x1xf32>
    %50 = vector.shape_cast %49 : vector<8x1xf32> to vector<1x8x1xf32>
    %cst_15 = arith.constant dense<0.000000e+00> : vector<1xf32>
    %51 = vector.multi_reduction <add>, %50, %cst_15 [1, 2] : vector<1x8x1xf32> to vector<1xf32>
    %52 = vector.shape_cast %51 : vector<1xf32> to vector<1x1x1xf32>
    %53 = vector.extract %52[0, 0, 0] : f32 from vector<1x1x1xf32>
    %c0_16 = arith.constant 0 : index
    %c0_17 = arith.constant 0 : index
    %54 = vector.load %arg4[%c0_16, %c0_17] : memref<8x1024xf32, #tpu.memory_space<vmem>>, vector<8x1024xf32>
    %c0_18 = arith.constant 0 : index
    %c0_19 = arith.constant 0 : index
    %55 = vector.load %arg5[%c0_18, %c0_19] : memref<8x1024xf32, #tpu.memory_space<vmem>>, vector<8x1024xf32>
    %56 = arith.subf %54, %55 : vector<8x1024xf32>
    %cst_20 = arith.constant 0.000000e+00 : f32
    %57 = vector.shape_cast %5 : vector<8x1xi1> to vector<8x1xi1>
    %58 = vector.broadcast %57 : vector<8x1xi1> to vector<8x1024xi1>
    %59 = vector.broadcast %cst_20 : f32 to vector<8x1024xf32>
    %60 = arith.select %58, %56, %59 : vector<8x1024xi1>, vector<8x1024xf32>
    %61 = arith.mulf %60, %60 : vector<8x1024xf32>
    %62 = vector.shape_cast %61 : vector<8x1024xf32> to vector<1x8x1024xf32>
    %cst_21 = arith.constant dense<0.000000e+00> : vector<1xf32>
    %63 = vector.multi_reduction <add>, %62, %cst_21 [1, 2] : vector<1x8x1024xf32> to vector<1xf32>
    %64 = vector.shape_cast %63 : vector<1xf32> to vector<1x1x1xf32>
    %65 = vector.extract %64[0, 0, 0] : f32 from vector<1x1x1xf32>
    %66 = tpu.iota {dimensions = array<i32: 1>} : vector<1x8x128xi32>
    %67 = tpu.iota {dimensions = array<i32: 2>} : vector<1x8x128xi32>
    %c0_i32 = arith.constant 0 : i32
    %68 = vector.broadcast %c0_i32 : i32 to vector<1x8x128xi32>
    %69 = arith.cmpi eq, %66, %68 : vector<1x8x128xi32>
    %70 = vector.broadcast %53 : f32 to vector<1x8x128xf32>
    %71 = vector.broadcast %65 : f32 to vector<1x8x128xf32>
    %72 = arith.select %69, %70, %71 : vector<1x8x128xi1>, vector<1x8x128xf32>
    %c0_i32_22 = arith.constant 0 : i32
    %73 = vector.broadcast %c0_i32_22 : i32 to vector<1x8x128xi32>
    %74 = arith.cmpi eq, %67, %73 : vector<1x8x128xi32>
    %c2_i32 = arith.constant 2 : i32
    %75 = vector.broadcast %c2_i32 : i32 to vector<1x8x128xi32>
    %76 = arith.cmpi slt, %66, %75 : vector<1x8x128xi32>
    %77 = arith.andi %74, %76 : vector<1x8x128xi1>
    %cst_23 = arith.constant 0.000000e+00 : f32
    %78 = vector.broadcast %cst_23 : f32 to vector<1x8x128xf32>
    %79 = arith.select %77, %72, %78 : vector<1x8x128xi1>, vector<1x8x128xf32>
    %c0_24 = arith.constant 0 : index
    %c0_25 = arith.constant 0 : index
    %c0_26 = arith.constant 0 : index
    %80 = vector.load %arg6[%c0_24, %c0_25, %c0_26] : memref<1x8x128xf32, #tpu.memory_space<vmem>>, vector<1x8x128xf32>
    tpu.vector_store %arg6[%c0_24, %c0_25, %c0_26], %79 {strides = array<i32>} : memref<1x8x128xf32, #tpu.memory_space<vmem>>, vector<1x8x128xf32>,
    return
  }
  func.func @transform_0(%arg0: i32) -> (i32, i32) {
    %c0_i32 = arith.constant 0 : i32
    %c0_i32_0 = arith.constant 0 : i32
    return %arg0, %c0_i32 : i32, i32
  }
  func.func @transform_1(%arg0: i32) -> (i32, i32) {
    %c0_i32 = arith.constant 0 : i32
    %c0_i32_0 = arith.constant 0 : i32
    return %arg0, %c0_i32 : i32, i32
  }
  func.func @transform_2(%arg0: i32) -> (i32, i32) {
    %c0_i32 = arith.constant 0 : i32
    %c0_i32_0 = arith.constant 0 : i32
    %c0_i32_1 = arith.constant 0 : i32
    return %c0_i32, %c0_i32_0 : i32, i32
  }
  func.func @transform_3(%arg0: i32) -> (i32, i32) {
    %c0_i32 = arith.constant 0 : i32
    %c0_i32_0 = arith.constant 0 : i32
    return %arg0, %c0_i32 : i32, i32
  }
  func.func @transform_4(%arg0: i32) -> (i32, i32) {
    %c0_i32 = arith.constant 0 : i32
    %c0_i32_0 = arith.constant 0 : i32
    return %arg0, %c0_i32 : i32, i32
  }
  func.func @transform_5(%arg0: i32) -> (i32, i32, i32) {
    %c0_i32 = arith.constant 0 : i32
    %c0_i32_0 = arith.constant 0 : i32
    %c0_i32_1 = arith.constant 0 : i32
    return %arg0, %c0_i32, %c0_i32_0 : i32, i32, i32
  }
}

</mosaic_0001>

<llo_original>
// kernel: tpu_custom_call.1
$region0: #{tpu_custom_call.1}
  #allocation0 [shape = 'u32[]', space=smem, size = 0x4, offset = 0x4, fixed_abs, tag = 'smem constant byte address 0x4 - core index']
  #allocation1 [shape = 'u32[144,128]{1,0:T(1,128)}', space=vmem, size = 0x12000, scoped, tag = 'internal scratch']
  %s0 = inlined_call_operand.hbm [shape: f32[16,256], index: 0, kind: input, shape index: {}]
  %s1 = inlined_call_operand.hbm [shape: f32[16,256], index: 1, kind: input, shape index: {}]
  %s2 = inlined_call_operand.vmem [shape: f32[1,256], index: 2, kind: input, shape index: {}]
  %s3 = inlined_call_operand.hbm [shape: f32[16,1024], index: 3, kind: input, shape index: {}]
  %s4 = inlined_call_operand.hbm [shape: f32[16,1024], index: 4, kind: input, shape index: {}]
  %s5 = inlined_call_operand.hbm [shape: f32[2,8,128], index: 5, kind: output, shape index: {}]
  %s6 = sld [smem:[#allocation0]]
  $region69: #{tpu_custom_call.1} parent=0
    _
  %s8 = ssub.s32 1, %s6
  %s9 = scalar_select 0, %s8, %s6
  $region1: #{tpu_custom_call.1} parent=0
    #allocation2 [shape = 'u8[16384]{0}', space=vmem, size = 0x4000, scoped, tag = 'input window, operand 0']
    #allocation3 [shape = 's32[2]{0}', space=sflag, size = 0x8, scoped, tag = 'scoped memory for tpu_custom_call.1']
    #allocation4 [shape = 's32[2]{0}', space=sflag, size = 0x8, scoped, tag = 'scoped memory for tpu_custom_call.1']
    #allocation5 [shape = 'u8[16384]{0}', space=vmem, size = 0x4000, scoped, tag = 'input window, operand 1']
    #allocation6 [shape = 's32[2]{0}', space=sflag, size = 0x8, scoped, tag = 'scoped memory for tpu_custom_call.1']
    #allocation7 [shape = 'u8[65536]{0}', space=vmem, size = 0x10000, scoped, tag = 'input window, operand 3']
    #allocation8 [shape = 'u8[65536]{0}', space=vmem, size = 0x10000, scoped, tag = 'input window, operand 4']
    #allocation9 [shape = 's32[2]{0}', space=sflag, size = 0x8, scoped, tag = 'scoped memory for tpu_custom_call.1']
    #allocation10 [shape = 'u8[8192]{0}', space=vmem, size = 0x2000, scoped, tag = 'output window, operand 0']
    %10 = vsyncpa [#allocation3], 0
    %s11 = scalar_lea.sflag [#allocation3], 1
    %12 = vsyncpa %s11, 0
    %13 = vsyncpa [#allocation6], 0
    %s14 = scalar_lea.sflag [#allocation6], 1
    %15 = vsyncpa %s14, 0
    %16 = vsyncpa [#allocation9], 0
    %s17 = scalar_lea.sflag [#allocation9], 1
    %18 = vsyncpa %s17, 0
    %19 = vsyncpa [#allocation4], 0
    %s20 = scalar_lea.sflag [#allocation4], 1
    %21 = vsyncpa %s20, 0
    loop: start=0, step=1, limit=4
    $region2: #{tpu_custom_call.1} parent=1 // loop_pre_header
      _
    $region3: #{tpu_custom_call.1} parent=1 // loop_header
      %s23 = sphi 0, %s27
      %p24 = scmp.ge.s32.totalorder %s23, 4
      %s33 = sphi 0, %s35
      %s36 = sphi 0, %s33
      %s37 = sphi 0, %s36
      %s53 = sphi 0, %s37
      %s59 = sphi 0, %s61
      %s62 = sphi 0, %s59
      %s63 = sphi 0, %s62
      %s79 = sphi 0, %s63
      %s83 = sphi 0, %s83
      %s85 = sphi 0, %s83
      %s86 = sphi 0, %s85
      %s100 = sphi 0, %s86
      %s106 = sphi 0, %s108
      %s109 = sphi 0, %s106
      %s110 = sphi 0, %s109
      %s126 = sphi 0, %s110
      %s132 = sphi 0, %s134
      %s135 = sphi 0, %s132
      %s136 = sphi 0, %s135
      %s152 = sphi 0, %s136
      %s158 = sphi 0, %s160
      %s161 = sphi 0, %s158
      %s162 = sphi 0, %s161
      %s178 = sphi 0, %s162
    $region4: #{tpu_custom_call.1} parent=1 // loop_header_branch
      %26 = sbr.rel (%p24) target = $region8
    $region5: #{tpu_custom_call.1} parent=1 // loop_body
      %s28 = ssub.s32 %s23, 1
      %s29 = ssub.s32 %s23, 2
      %s30 = sadd.s32 %s23, 1
      %s31 = ssub.s32 %s23, %s30
      %p32 = scmp.eq.s32.totalorder %s31, 0
      %s34 = sadd.s32 %s33, 1
      %s35 = scalar_select %p32, %s33, %s34
      %p38 = pneg %p32
      %p39 = scmp.eq.s32.totalorder %s23, 1
      %p40 = por %p38, %p39
      %p41 = scmp.ne.s32.totalorder %s33, %s36
      %p42 = scmp.eq.s32.totalorder %s23, 0
      %p43 = por %p41, %p42
      %p44 = scmp.ne.s32.totalorder %s33, %s36
      %p45 = scmp.eq.s32.totalorder %s28, 1
      %p46 = por %p44, %p45
      %p47 = scmp.ne.s32.totalorder %s36, %s37
      %p48 = scmp.eq.s32.totalorder %s28, 0
      %p49 = por %p47, %p48
      %p50 = scmp.ne.s32.totalorder %s36, %s37
      %p51 = scmp.eq.s32.totalorder %s29, 1
      %p52 = por %p50, %p51
      %p54 = scmp.ne.s32.totalorder %s37, %s53
      %p55 = scmp.eq.s32.totalorder %s29, 0
      %p56 = por %p54, %p55
      %s57 = ssub.s32 %s23, %s30
      %p58 = scmp.eq.s32.totalorder %s57, 0
      %s60 = sadd.s32 %s59, 1
      %s61 = scalar_select %p58, %s59, %s60
      %p64 = pneg %p58
      %p65 = scmp.eq.s32.totalorder %s23, 1
      %p66 = por %p64, %p65
      %p67 = scmp.ne.s32.totalorder %s59, %s62
      %p68 = scmp.eq.s32.totalorder %s23, 0
      %p69 = por %p67, %p68
      %p70 = scmp.ne.s32.totalorder %s59, %s62
      %p71 = scmp.eq.s32.totalorder %s28, 1
      %p72 = por %p70, %p71
      %p73 = scmp.ne.s32.totalorder %s62, %s63
      %p74 = scmp.eq.s32.totalorder %s28, 0
      %p75 = por %p73, %p74
      %p76 = scmp.ne.s32.totalorder %s62, %s63
      %p77 = scmp.eq.s32.totalorder %s29, 1
      %p78 = por %p76, %p77
      %p80 = scmp.ne.s32.totalorder %s63, %s79
      %p81 = scmp.eq.s32.totalorder %s29, 0
      %p82 = por %p80, %p81
      %s84 = sadd.s32 %s83, 1
      %p87 = scmp.eq.s32.totalorder %s23, 1
      %p88 = scmp.ne.s32.totalorder %s83, %s85
      %p89 = scmp.eq.s32.totalorder %s23, 0
      %p90 = por %p88, %p89
      %p91 = scmp.ne.s32.totalorder %s83, %s85
      %p92 = scmp.eq.s32.totalorder %s28, 1
      %p93 = por %p91, %p92
      %p94 = scmp.ne.s32.totalorder %s85, %s86
      %p95 = scmp.eq.s32.totalorder %s28, 0
      %p96 = por %p94, %p95
      %p97 = scmp.ne.s32.totalorder %s85, %s86
      %p98 = scmp.eq.s32.totalorder %s29, 1
      %p99 = por %p97, %p98
      %p101 = scmp.ne.s32.totalorder %s86, %s100
      %p102 = scmp.eq.s32.totalorder %s29, 0
      %p103 = por %p101, %p102
      %s104 = ssub.s32 %s23, %s30
      %p105 = scmp.eq.s32.totalorder %s104, 0
      %s107 = sadd.s32 %s106, 1
      %s108 = scalar_select %p105, %s106, %s107
      %p111 = pneg %p105
      %p112 = scmp.eq.s32.totalorder %s23, 1
      %p113 = por %p111, %p112
      %p114 = scmp.ne.s32.totalorder %s106, %s109
      %p115 = scmp.eq.s32.totalorder %s23, 0
      %p116 = por %p114, %p115
      %p117 = scmp.ne.s32.totalorder %s106, %s109
      %p118 = scmp.eq.s32.totalorder %s28, 1
      %p119 = por %p117, %p118
      %p120 = scmp.ne.s32.totalorder %s109, %s110
      %p121 = scmp.eq.s32.totalorder %s28, 0
      %p122 = por %p120, %p121
      %p123 = scmp.ne.s32.totalorder %s109, %s110
      %p124 = scmp.eq.s32.totalorder %s29, 1
      %p125 = por %p123, %p124
      %p127 = scmp.ne.s32.totalorder %s110, %s126
      %p128 = scmp.eq.s32.totalorder %s29, 0
      %p129 = por %p127, %p128
      %s130 = ssub.s32 %s23, %s30
      %p131 = scmp.eq.s32.totalorder %s130, 0
      %s133 = sadd.s32 %s132, 1
      %s134 = scalar_select %p131, %s132, %s133
      %p137 = pneg %p131
      %p138 = scmp.eq.s32.totalorder %s23, 1
      %p139 = por %p137, %p138
      %p140 = scmp.ne.s32.totalorder %s132, %s135
      %p141 = scmp.eq.s32.totalorder %s23, 0
      %p142 = por %p140, %p141
      %p143 = scmp.ne.s32.totalorder %s132, %s135
      %p144 = scmp.eq.s32.totalorder %s28, 1
      %p145 = por %p143, %p144
      %p146 = scmp.ne.s32.totalorder %s135, %s136
      %p147 = scmp.eq.s32.totalorder %s28, 0
      %p148 = por %p146, %p147
      %p149 = scmp.ne.s32.totalorder %s135, %s136
      %p150 = scmp.eq.s32.totalorder %s29, 1
      %p151 = por %p149, %p150
      %p153 = scmp.ne.s32.totalorder %s136, %s152
      %p154 = scmp.eq.s32.totalorder %s29, 0
      %p155 = por %p153, %p154
      %s156 = ssub.s32 %s23, %s30
      %p157 = scmp.eq.s32.totalorder %s156, 0
      %s159 = sadd.s32 %s158, 1
      %s160 = scalar_select %p157, %s158, %s159
      %p163 = pneg %p157
      %p164 = scmp.eq.s32.totalorder %s23, 1
      %p165 = por %p163, %p164
      %p166 = scmp.ne.s32.totalorder %s158, %s161
      %p167 = scmp.eq.s32.totalorder %s23, 0
      %p168 = por %p166, %p167
      %p169 = scmp.ne.s32.totalorder %s158, %s161
      %p170 = scmp.eq.s32.totalorder %s28, 1
      %p171 = por %p169, %p170
      %p172 = scmp.ne.s32.totalorder %s161, %s162
      %p173 = scmp.eq.s32.totalorder %s28, 0
      %p174 = por %p172, %p173
      %p175 = scmp.ne.s32.totalorder %s161, %s162
      %p176 = scmp.eq.s32.totalorder %s29, 1
      %p177 = por %p175, %p176
      %p179 = scmp.ne.s32.totalorder %s162, %s178
      %p180 = scmp.eq.s32.totalorder %s29, 0
      %p181 = por %p179, %p180
      %p182 = scmp.le.s32.totalorder 1, %s23
      %p183 = scmp.lt.s32.totalorder %s23, 3
      %p184 = pnand %p182, %p183
      %p185 = pneg %p184
      // Predicated region
      $region9: #{tpu_custom_call.1} parent=5 // pred_check
        _
      $region10: #{tpu_custom_call.1} parent=5 // pred_check_branch
        %187 = sbr.rel (%p184) target = $region12
      $region11: #{tpu_custom_call.1} parent=5 // pred_region
        %s188 = ssub.s32 %s23, 1
        // Predicated region
        $region13: #{tpu_custom_call.1} parent=11 // pred_check
          %p189 = pneg %p96
        $region14: #{tpu_custom_call.1} parent=11 // pred_check_branch
          %191 = sbr.rel (%p189) target = $region16
        $region15: #{tpu_custom_call.1} parent=11 // pred_region
          _
        $region16: #{tpu_custom_call.1} parent=11 // pred_fallthru
          _
      $region12: #{tpu_custom_call.1} parent=5 // pred_fallthru
        _
      %p192 = scmp.lt.s32.totalorder %s23, 2
      // Predicated region
      $region17: #{tpu_custom_call.1} parent=5 // pred_check
        %p193 = pneg %p192
      $region18: #{tpu_custom_call.1} parent=5 // pred_check_branch
        %195 = sbr.rel (%p193) target = $region20
      $region19: #{tpu_custom_call.1} parent=5 // pred_region
        // Predicated region
        $region21: #{tpu_custom_call.1} parent=19 // pred_check
          %p196 = pneg %p43
        $region22: #{tpu_custom_call.1} parent=19 // pred_check_branch
          %198 = sbr.rel (%p196) target = $region24
        $region23: #{tpu_custom_call.1} parent=19 // pred_region
          %s199 = sand.u32 %s33, 1
          %s200 = scalar_lea.sflag [#allocation3], %s199
          %s201 = sand.u32 %s33, 1
          %s202 = smul.addr %s201, 16
          %s203 = scalar_lea.vmem [#allocation2], %s202
          %s205 = ssub.s32 256, 256
          %206 = vsyncadd %s200, %s205
          %s207 = smul.addr %s23, 2
          %s208 = smul.addr %s207, 128
          %s209 = scalar_lea.hbm %s0, %s208
          %s211 = sshll.u32 %s203, 4
          %s212 = int_to_ptr.vmem [resolvable:$true] %s211
          %214 = dma.hbm_to_vmem [thread:$0]  %s209, 256, %s212, %s200
        $region24: #{tpu_custom_call.1} parent=19 // pred_fallthru
          _
        // Predicated region
        $region25: #{tpu_custom_call.1} parent=19 // pred_check
          %p215 = pneg %p69
        $region26: #{tpu_custom_call.1} parent=19 // pred_check_branch
          %217 = sbr.rel (%p215) target = $region28
        $region27: #{tpu_custom_call.1} parent=19 // pred_region
          %s218 = sand.u32 %s23, 1
          %s219 = scalar_lea.sflag [#allocation6], %s218
          %s220 = sand.u32 %s59, 1
          %s221 = smul.addr %s220, 16
          %s222 = scalar_lea.vmem [#allocation5], %s221
          %s224 = ssub.s32 256, 256
          %225 = vsyncadd %s219, %s224
          %s226 = smul.addr %s23, 2
          %s227 = smul.addr %s226, 128
          %s228 = scalar_lea.hbm %s1, %s227
          %s230 = sshll.u32 %s222, 4
          %s231 = int_to_ptr.vmem [resolvable:$true] %s230
          %233 = dma.hbm_to_vmem [thread:$0]  %s228, 256, %s231, %s219
        $region28: #{tpu_custom_call.1} parent=19 // pred_fallthru
          _
        // Predicated region
        $region29: #{tpu_custom_call.1} parent=19 // pred_check
          %p234 = pneg %p116
        $region30: #{tpu_custom_call.1} parent=19 // pred_check_branch
          %236 = sbr.rel (%p234) target = $region32
        $region31: #{tpu_custom_call.1} parent=19 // pred_region
          %s237 = sand.u32 %s23, 1
          %s238 = scalar_lea.sflag [#allocation6], %s237
          %s239 = sand.u32 %s106, 1
          %s240 = smul.addr %s239, 64
          %s241 = scalar_lea.vmem [#allocation7], %s240
          %s243 = ssub.s32 1024, 1024
          %244 = vsyncadd %s238, %s243
          %s245 = smul.addr %s23, 8
          %s246 = smul.addr %s245, 128
          %s247 = scalar_lea.hbm %s3, %s246
          %s249 = sshll.u32 %s241, 4
          %s250 = int_to_ptr.vmem [resolvable:$true] %s249
          %252 = dma.hbm_to_vmem [thread:$0]  %s247, 1024, %s250, %s238
        $region32: #{tpu_custom_call.1} parent=19 // pred_fallthru
          _
        // Predicated region
        $region33: #{tpu_custom_call.1} parent=19 // pred_check
          %p253 = pneg %p142
        $region34: #{tpu_custom_call.1} parent=19 // pred_check_branch
          %255 = sbr.rel (%p253) target = $region36
        $region35: #{tpu_custom_call.1} parent=19 // pred_region
          %s256 = sand.u32 %s132, 1
          %s257 = scalar_lea.sflag [#allocation9], %s256
          %s258 = sand.u32 %s132, 1
          %s259 = smul.addr %s258, 64
          %s260 = scalar_lea.vmem [#allocation8], %s259
          %s262 = ssub.s32 1024, 1024
          %263 = vsyncadd %s257, %s262
          %s264 = smul.addr %s23, 8
          %s265 = smul.addr %s264, 128
          %s266 = scalar_lea.hbm %s4, %s265
          %s268 = sshll.u32 %s260, 4
          %s269 = int_to_ptr.vmem [resolvable:$true] %s268
          %271 = dma.hbm_to_vmem [thread:$0]  %s266, 1024, %s269, %s257
        $region36: #{tpu_custom_call.1} parent=19 // pred_fallthru
          _
      $region20: #{tpu_custom_call.1} parent=5 // pred_fallthru
        _
      %p272 = scmp.le.s32.totalorder 1, %s23
      %p273 = scmp.lt.s32.totalorder %s23, 3
      %p274 = pnand %p272, %p273
      %p275 = pneg %p274
      // Predicated region
      $region37: #{tpu_custom_call.1} parent=5 // pred_check
        _
      $region38: #{tpu_custom_call.1} parent=5 // pred_check_branch
        %277 = sbr.rel (%p274) target = $region40
      $region39: #{tpu_custom_call.1} parent=5 // pred_region
        %s278 = ssub.s32 %s23, 1
        %s279 = sand.u32 %s36, 1
        %s280 = scalar_lea.sflag [#allocation3], %s279
        %s281 = sand.u32 %s36, 1
        %s282 = smul.addr %s281, 16
        %s283 = scalar_lea.vmem [#allocation2], %s282
        // Predicated region
        $region41: #{tpu_custom_call.1} parent=39 // pred_check
          %p284 = pneg %p49
        $region42: #{tpu_custom_call.1} parent=39 // pred_check_branch
          %286 = sbr.rel (%p284) target = $region44
        $region43: #{tpu_custom_call.1} parent=39 // pred_region
          %287 = dma.done %s280, 256
        $region44: #{tpu_custom_call.1} parent=39 // pred_fallthru
          _
        %s288 = sand.u32 %s28, 1
        %s289 = scalar_lea.sflag [#allocation6], %s288
        %s290 = sand.u32 %s62, 1
        %s291 = smul.addr %s290, 16
        %s292 = scalar_lea.vmem [#allocation5], %s291
        // Predicated region
        $region45: #{tpu_custom_call.1} parent=39 // pred_check
          %p293 = pneg %p75
        $region46: #{tpu_custom_call.1} parent=39 // pred_check_branch
          %295 = sbr.rel (%p293) target = $region48
        $region47: #{tpu_custom_call.1} parent=39 // pred_region
          %296 = dma.done %s289, 256
        $region48: #{tpu_custom_call.1} parent=39 // pred_fallthru
          _
        %s297 = sand.u32 %s28, 1
        %s298 = scalar_lea.sflag [#allocation6], %s297
        %s299 = sand.u32 %s109, 1
        %s300 = smul.addr %s299, 64
        %s301 = scalar_lea.vmem [#allocation7], %s300
        // Predicated region
        $region49: #{tpu_custom_call.1} parent=39 // pred_check
          %p302 = pneg %p122
        $region50: #{tpu_custom_call.1} parent=39 // pred_check_branch
          %304 = sbr.rel (%p302) target = $region52
        $region51: #{tpu_custom_call.1} parent=39 // pred_region
          %305 = dma.done %s298, 1024
        $region52: #{tpu_custom_call.1} parent=39 // pred_fallthru
          _
        %s306 = sand.u32 %s135, 1
        %s307 = scalar_lea.sflag [#allocation9], %s306
        %s308 = sand.u32 %s135, 1
        %s309 = smul.addr %s308, 64
        %s310 = scalar_lea.vmem [#allocation8], %s309
        // Predicated region
        $region53: #{tpu_custom_call.1} parent=39 // pred_check
          %p311 = pneg %p148
        $region54: #{tpu_custom_call.1} parent=39 // pred_check_branch
          %313 = sbr.rel (%p311) target = $region56
        $region55: #{tpu_custom_call.1} parent=39 // pred_region
          %314 = dma.done %s307, 1024
        $region56: #{tpu_custom_call.1} parent=39 // pred_fallthru
          _
        %s315 = sand.u32 %s36, 1
        %s316 = scalar_lea.sflag [#allocation3], %s315
        %s317 = sand.u32 %s36, 1
        %s318 = smul.addr %s317, 16
        %s319 = scalar_lea.vmem [#allocation2], %s318
        %p320 = pneg %p49
        %p321 = pneg %p46
        %s322 = sand.u32 %s28, 1
        %s323 = scalar_lea.sflag [#allocation6], %s322
        %s324 = sand.u32 %s62, 1
        %s325 = smul.addr %s324, 16
        %s326 = scalar_lea.vmem [#allocation5], %s325
        %p327 = pneg %p75
        %p328 = pneg %p72
        %p329 = pneg %p96
        %p330 = pneg %p93
        %s331 = sand.u32 %s28, 1
        %s332 = scalar_lea.sflag [#allocation6], %s331
        %s333 = sand.u32 %s109, 1
        %s334 = smul.addr %s333, 64
        %s335 = scalar_lea.vmem [#allocation7], %s334
        %p336 = pneg %p122
        %p337 = pneg %p119
        %s338 = sand.u32 %s135, 1
        %s339 = scalar_lea.sflag [#allocation9], %s338
        %s340 = sand.u32 %s135, 1
        %s341 = smul.addr %s340, 64
        %s342 = scalar_lea.vmem [#allocation8], %s341
        %p343 = pneg %p148
        %p344 = pneg %p145
        %p345 = pneg %p174
        %p346 = pneg %p171
        %s347 = sand.u32 %s161, 1
        %s348 = scalar_lea.sflag [#allocation4], %s347
        %s349 = sand.u32 %s161, 1
        %s350 = smul.addr %s349, 8
        %s351 = scalar_lea.vmem [#allocation10], %s350
        %s352 = smul.u32 %s28, 8
        %v353 = vlaneseq
        %v354 = vshrl.u32 %v353, 7
        %v355 = vstv %s352
        %v356 = vadd.s32 %v355, %v354
        %vm357 = vcmp.lt.s32.totalorder %v356, 16
        %v358 = vld [vmem:[%s283] sm:$0xff]
        %v359 = vld [vmem:[%s283 + $0x8] sm:$0xff]
        %v360 = vmul.f32 %v358, 10.0
        %v361 = vmul.f32 %v359, 10.0
        %v362 = vld [vmem:[%s292] sm:$0xff]
        %v363 = vld [vmem:[%s292 + $0x8] sm:$0xff]
        %v364 = vld [vmem:[%s2] sm:$0x3]
        %v366 = vlaneseq
        %v367 = vshrl.u32 %v366, 7
        %v368 = vsub.s32 0, %v367
        %v369 = vrot.slane %v364, %v368
        %v370 = vlaneseq
        %v371 = vshrl.u32 %v370, 7
        %v372 = vsub.s32 1, %v371
        %v373 = vrot.slane %v364, %v372
        %v376 = vsub.f32 %v362, %v369
        %v377 = vsub.f32 %v363, %v373
        %v378 = vmul.f32 %v376, 25.0
        %v379 = vmul.f32 %v377, 25.0
        %v380 = vsel %vm357, 1, 0
        %vm381 = vcmp.eq.s32.totalorder %v380, 1
        %v382 = vsel %vm381, %v360, 0.0
        %v383 = vsel %vm381, %v361, 0.0
        %v384 = vsel %vm381, %v378, 0.0
        %v385 = vsel %vm381, %v379, 0.0
        %v386 = vmax.f32 %v382, %v383
        %387 = vmax.xlane.f32.xlu0 %v386
        %v388 = vpop.xlane.xlu0 %387
        %v389 = vsub.f32 %v382, %v388
        %v390 = vsub.f32 %v383, %v388
        %v391 = vmul.f32 %v389, 1.442695
        %v392 = vpow.pop %v391
        %v393 = vmul.f32 %v390, 1.442695
        %v394 = vpow.pop %v393
        %v395 = vadd.f32 %v392, %v394
        %396 = vadd.xlane.f32.xlu0 %v395
        %v397 = vpop.xlane.xlu0 %396
        %v398 = vlog2.pop %v397
        %v399 = vmul.f32 %v398, 0.6931472
        %v400 = vmax.f32 %v384, %v385
        %401 = vmax.xlane.f32.xlu0 %v400
        %v402 = vpop.xlane.xlu0 %401
        %v403 = vsub.f32 %v384, %v402
        %v404 = vsub.f32 %v385, %v402
        %v405 = vmul.f32 %v403, 1.442695
        %v406 = vpow.pop %v405
        %v407 = vmul.f32 %v404, 1.442695
        %v408 = vpow.pop %v407
        %v409 = vadd.f32 %v406, %v408
        %410 = vadd.xlane.f32.xlu0 %v409
        %v411 = vpop.xlane.xlu0 %410
        %v412 = vrcp.pop %v411
        %v413 = vmul.f32 %v411, %v412
        %v414 = vsub.f32 2.0, %v413
        %v415 = vmul.f32 %v412, %v414
        %v416 = vmul.f32 %v406, %v389
        %v417 = vmul.f32 %v408, %v390
        %v418 = vadd.f32 %v416, %v417
        %419 = vadd.xlane.f32.xlu0 %v418
        %v420 = vpop.xlane.xlu0 %419
        %v421 = vmul.f32 %v415, %v420
        %v422 = vsub.f32 %v421, %v399
        %v423 = vsel %vm357, %v422, 0.0
        %vm424 = vcmask 7168
        %v425 = vsel %vm424, %v423, 0.0
        %426 = vadd.xlane.f32.xlu0 %v425
        %v427 = vpop.xlane.xlu0 %426
        %v428 = vrot.slane %v427, 4
        %v429 = vadd.f32 %v427, %v428
        %v430 = vrot.slane %v429, 2
        %v431 = vadd.f32 %v429, %v430
        %v432 = vrot.slane %v431, 1
        %v433 = vadd.f32 %v431, %v432
        %s434 = vtos %v433
        %v435 = vld [vmem:[%s301] sm:$0xff]
        %v436 = vld [vmem:[%s301 + $0x8] sm:$0xff]
        %v437 = vld [vmem:[%s301 + $0x10] sm:$0xff]
        %v438 = vld [vmem:[%s301 + $0x18] sm:$0xff]
        %v439 = vld [vmem:[%s301 + $0x20] sm:$0xff]
        %v440 = vld [vmem:[%s301 + $0x28] sm:$0xff]
        %v441 = vld [vmem:[%s301 + $0x30] sm:$0xff]
        %v442 = vld [vmem:[%s301 + $0x38] sm:$0xff]
        %v443 = vld [vmem:[%s310] sm:$0xff]
        %v444 = vld [vmem:[%s310 + $0x8] sm:$0xff]
        %v445 = vld [vmem:[%s310 + $0x10] sm:$0xff]
        %v446 = vld [vmem:[%s310 + $0x18] sm:$0xff]
        %v447 = vld [vmem:[%s310 + $0x20] sm:$0xff]
        %v448 = vld [vmem:[%s310 + $0x28] sm:$0xff]
        %v449 = vld [vmem:[%s310 + $0x30] sm:$0xff]
        %v450 = vld [vmem:[%s310 + $0x38] sm:$0xff]
        %v451 = vsub.f32 %v435, %v443
        %v452 = vsub.f32 %v436, %v444
        %v453 = vsub.f32 %v437, %v445
        %v454 = vsub.f32 %v438, %v446
        %v455 = vsub.f32 %v439, %v447
        %v456 = vsub.f32 %v440, %v448
        %v457 = vsub.f32 %v441, %v449
        %v458 = vsub.f32 %v442, %v450
        %v459 = vsel %vm381, %v451, 0.0
        %v460 = vsel %vm381, %v452, 0.0
        %v461 = vsel %vm381, %v453, 0.0
        %v462 = vsel %vm381, %v454, 0.0
        %v463 = vsel %vm381, %v455, 0.0
        %v464 = vsel %vm381, %v456, 0.0
        %v465 = vsel %vm381, %v457, 0.0
        %v466 = vsel %vm381, %v458, 0.0
        %v467 = vmul.f32 %v459, %v459
        %v468 = vmul.f32 %v460, %v460
        %v469 = vmul.f32 %v461, %v461
        %v470 = vmul.f32 %v462, %v462
        %v471 = vmul.f32 %v463, %v463
        %v472 = vmul.f32 %v464, %v464
        %v473 = vmul.f32 %v465, %v465
        %v474 = vmul.f32 %v466, %v466
        %v475 = vadd.f32 %v467, %v468
        %v476 = vadd.f32 %v475, %v469
        %v477 = vadd.f32 %v476, %v470
        %v478 = vadd.f32 %v477, %v471
        %v479 = vadd.f32 %v478, %v472
        %v480 = vadd.f32 %v479, %v473
        %v481 = vadd.f32 %v480, %v474
        %482 = vadd.xlane.f32.xlu0 %v481
        %v483 = vpop.xlane.xlu0 %482
        %v484 = vrot.slane %v483, 4
        %v485 = vadd.f32 %v483, %v484
        %v486 = vrot.slane %v485, 2
        %v487 = vadd.f32 %v485, %v486
        %v488 = vrot.slane %v487, 1
        %v489 = vadd.f32 %v487, %v488
        %s490 = vtos %v489
        %v491 = vlaneseq
        %v492 = vand.u32 %v491, 127
        %vm493 = vcmp.eq.s32.totalorder %v354, 0
        %v494 = vstv %s434
        %v495 = vstv %s490
        %v496 = vsel %vm493, %v494, %v495
        %vm497 = vcmp.eq.s32.totalorder %v492, 0
        %vm498 = vcmp.lt.s32.totalorder %v354, 2
        %vm499 = vmand %vm497, %vm498
        %v500 = vsel %vm499, %v496, 0.0
        %501 = vst [vmem:[%s351] sm:$0xff] %v500
        %s502 = sand.u32 %s161, 1
        %s503 = scalar_lea.sflag [#allocation4], %s502
        %s504 = sand.u32 %s161, 1
        %s505 = smul.addr %s504, 8
        %s506 = scalar_lea.vmem [#allocation10], %s505
        // Predicated region
        $region57: #{tpu_custom_call.1} parent=39 // pred_check
          %p507 = pneg %p171
        $region58: #{tpu_custom_call.1} parent=39 // pred_check_branch
          %509 = sbr.rel (%p507) target = $region60
        $region59: #{tpu_custom_call.1} parent=39 // pred_region
          %s511 = ssub.s32 128, 128
          %512 = vsyncadd %s503, %s511
          %s513 = smul.addr %s28, 128
          %s514 = scalar_lea.hbm %s5, %s513
          %s516 = sshll.u32 %s506, 4
          %s517 = int_to_ptr.vmem [resolvable:$true] %s516
          %519 = dma.vmem_to_hbm [thread:$0]  %s517, 128, %s514, %s503
        $region60: #{tpu_custom_call.1} parent=39 // pred_fallthru
          _
      $region40: #{tpu_custom_call.1} parent=5 // pred_fallthru
        _
      %p520 = scmp.le.s32.totalorder 2, %s23
      // Predicated region
      $region61: #{tpu_custom_call.1} parent=5 // pred_check
        %p521 = pneg %p520
      $region62: #{tpu_custom_call.1} parent=5 // pred_check_branch
        %523 = sbr.rel (%p521) target = $region64
      $region63: #{tpu_custom_call.1} parent=5 // pred_region
        %s524 = ssub.s32 %s23, 2
        // Predicated region
        $region65: #{tpu_custom_call.1} parent=63 // pred_check
          %p525 = pneg %p177
        $region66: #{tpu_custom_call.1} parent=63 // pred_check_branch
          %527 = sbr.rel (%p525) target = $region68
        $region67: #{tpu_custom_call.1} parent=63 // pred_region
          %s528 = sand.u32 %s162, 1
          %s529 = scalar_lea.sflag [#allocation4], %s528
          %s530 = sand.u32 %s162, 1
          %s531 = smul.addr %s530, 8
          %s532 = scalar_lea.vmem [#allocation10], %s531
          %533 = dma.done %s529, 128
        $region68: #{tpu_custom_call.1} parent=63 // pred_fallthru
          _
      $region64: #{tpu_custom_call.1} parent=5 // pred_fallthru
        _
    $region6: #{tpu_custom_call.1} parent=1 // loop_footer
      %s27 = sadd.s32 1, %s23
    $region7: #{tpu_custom_call.1} parent=1 // loop_footer_branch
      %22 = sbr.rel target = $region3
    $region8: #{tpu_custom_call.1} parent=1 // loop_exit
      _
    %534 = vsyncpa [#allocation3], 1
    %s535 = scalar_lea.sflag [#allocation3], 1
    %536 = vsyncpa %s535, 1
    %537 = vsyncpa [#allocation6], 1
    %s538 = scalar_lea.sflag [#allocation6], 1
    %539 = vsyncpa %s538, 1
    %540 = vsyncpa [#allocation9], 1
    %s541 = scalar_lea.sflag [#allocation9], 1
    %542 = vsyncpa %s541, 1
    %543 = vsyncpa [#allocation4], 1
    %s544 = scalar_lea.sflag [#allocation4], 1
    %545 = vsyncpa %s544, 1

</llo_original>
